<compile_context>
chip_gen: v5e
topology: v5e:2x2
jax: 0.10.0
libtpu: 0.0.40
codegen_flags: <defaults>
</compile_context>

<pallas_src>
import functools

import jax
import jax.numpy as jnp
from jax import lax
from jax.experimental import pallas as pl
from jax.experimental.pallas import tpu as pltpu


def _layernorm_kernel(x_ref, o_ref, *, eps: float, n: int):
    # x_ref: (row_tile, H) block in VMEM; each row normalized independently.
    x = x_ref[...].astype(jnp.float32)

    # Two-pass statistics (numerically stable): mean first, then centered
    # sum of squares.  Both reductions are VPU/XLU work hidden under HBM.
    mean = jnp.sum(x, axis=-1, keepdims=True) * jnp.float32(1.0 / n)
    xc = x - mean
    # Unbiased variance; n == 1 yields 0/0 = NaN, mirroring
    # torch.var_mean(unbiased=True) on a single element.
    var = jnp.sum(xc * xc, axis=-1, keepdims=True) / jnp.float32(n - 1)

    # rsqrt runs on the EUP (its own bundle slot -> effectively free).
    o_ref[...] = (xc * lax.rsqrt(var + jnp.float32(eps))).astype(o_ref.dtype)


def _chip_info():
    """Best-effort (physical VMEM bytes per core, TensorCores per chip)."""
    vmem = 64 * 1024 * 1024  # conservative default (v7x-like per-TC VMEM)
    cores = 1
    try:
        info = pltpu.get_tpu_info()
        v = getattr(info, "vmem_capacity_bytes", None)
        if v:
            vmem = int(v)
        for name in ("num_cores", "num_cores_per_chip", "core_count"):
            c = getattr(info, name, None)
            if c:
                cores = int(c)
                break
    except Exception:
        pass
    try:
        kind = jax.devices()[0].device_kind.lower()
        # Megacore / multi-TC chips (v4, v5p, v7x).  v5e ("v5 lite") and v6e
        # are single-TC and must not match.
        if any(tag in kind for tag in ("v7", "v4", "v5p")):
            cores = max(cores, 2)
    except Exception:
        pass
    return vmem, cores


def _pick_row_tile(n_rows: int, h: int, itemsize: int, *, sublane: int,
                   tile_budget_bytes: int, num_cores: int) -> int:
    """Rows per block: as many as the byte budget allows (no fixed row cap).

    Per-row accounting covers the double-buffered input and output tiles
    (2 * itemsize each) plus two f32 working arrays (x and x - mean):
    h * (4 * itemsize + 8) bytes per row.
    """
    bytes_per_row = h * (4 * itemsize + 8)
    tile = tile_budget_bytes // max(1, bytes_per_row)
    tile = (tile // sublane) * sublane
    if tile <= 0:
        # Enormous H: fall back to the minimal dtype-aligned tile.
        # TODO(synk): H-blocked reduction path for rows that still overflow.
        return sublane
    # Don't allocate (much) more rows than the problem has.
    tile = min(tile, pl.cdiv(n_rows, sublane) * sublane)
    tile = max(tile, sublane)
    # Multi-TensorCore chips only: keep enough (even) grid steps so every core
    # gets an equal share of rows under dimension_semantics=("parallel",).
    if num_cores > 1 and n_rows > sublane:
        target_steps = 2 * num_cores
        if pl.cdiv(n_rows, tile) < target_steps:
            split = pl.cdiv(pl.cdiv(n_rows, target_steps), sublane) * sublane
            tile = max(sublane, min(tile, split))
    return tile


def layer_norm(x: jax.Array, eps: float = 1e-5, *, row_tile: int | None = None) -> jax.Array:
    """LayerNorm over the last dimension (dim=-1), unbiased variance."""
    orig_shape = x.shape
    h = orig_shape[-1]
    x2d = x.reshape(-1, h)
    r = x2d.shape[0]

    itemsize = x2d.dtype.itemsize
    # Sublane packing: 8 rows (f32) / 16 (bf16) / 32 (int8, fp8) per vreg.
    sublane = max(8, 32 // max(1, itemsize))

    vmem_phys, num_cores = _chip_info()
    big_vmem = vmem_phys >= 100 * 1024 * 1024          # v5e/v6e: 128 MiB
    tile_budget = (48 if big_vmem else 24) * 1024 * 1024
    vmem_cap = (100 if big_vmem else 48) * 1024 * 1024

    if row_tile is None:
        row_tile = _pick_row_tile(r, h, itemsize, sublane=sublane,
                                  tile_budget_bytes=tile_budget,
                                  num_cores=num_cores)

    grid = (pl.cdiv(r, row_tile),)  # no row padding; last block may be partial

    # Raise the scoped VMEM limit enough for the chosen tile (incl. f32
    # temps + double buffering), capped per chip generation.
    est_bytes = row_tile * h * (4 * itemsize + 8)
    vmem_limit = int(min(vmem_cap, max(32 * 1024 * 1024, int(1.25 * est_bytes))))

    kernel = functools.partial(_layernorm_kernel, eps=eps, n=h)

    out2d = pl.pallas_call(
        kernel,
        out_shape=jax.ShapeDtypeStruct((r, h), x.dtype),
        grid_spec=pltpu.PrefetchScalarGridSpec(
            num_scalar_prefetch=0,
            grid=grid,
            in_specs=[pl.BlockSpec((row_tile, h), lambda i: (i, 0))],
            out_specs=pl.BlockSpec((row_tile, h), lambda i: (i, 0)),
        ),
        compiler_params=pltpu.CompilerParams(
            dimension_semantics=("parallel",),
            vmem_limit_bytes=vmem_limit,
        ),
    )(x2d)

    return out2d.reshape(orig_shape)


def _reference(x: jax.Array, eps: float = 1e-5) -> jax.Array:
    xf = x.astype(jnp.float32)
    mean = jnp.mean(xf, axis=-1, keepdims=True)
    var = jnp.var(xf, axis=-1, keepdims=True, ddof=1)  # unbiased
    return ((xf - mean) / jnp.sqrt(var + eps)).astype(x.dtype)


if __name__ == "__main__":
    key = jax.random.PRNGKey(0)
    k0, k1, k2 = jax.random.split(key, 3)

    # batch=2, seq=8, hidden=32  (normalize over hidden, the last dim)
    x = jax.random.normal(k0, (2, 8, 32), dtype=jnp.float32) * 3.0 + 1.5
    y = jax.block_until_ready(layer_norm(x, eps=1e-5))
    y_ref = _reference(x, eps=1e-5)
    assert y.shape == x.shape and y.dtype == x.dtype
    assert jnp.allclose(y, y_ref, atol=1e-5, rtol=1e-5), "mismatch vs reference"

    # Row count not a multiple of the tile / sublane: exercises the un-padded
    # partial last block (masked output writeback).
    x2 = jax.random.normal(k1, (3, 5, 32), dtype=jnp.float32) - 0.7
    y2 = jax.block_until_ready(layer_norm(x2, eps=1e-5))
    assert jnp.allclose(y2, _reference(x2, eps=1e-5), atol=1e-5, rtol=1e-5), (
        "mismatch vs reference (partial block)")

    # Large-mean input: exercises the two-pass (stable) variance.
    x3 = jax.random.normal(k2, (4, 32), dtype=jnp.float32) + 100.0
    y3 = jax.block_until_ready(layer_norm(x3, eps=1e-5))
    assert jnp.allclose(y3, _reference(x3, eps=1e-5), atol=1e-4, rtol=1e-4), (
        "mismatch vs reference (large mean)")

    print("KERNEL_OK")
</pallas_src>

<mosaic_0001>
module attributes {stable_mosaic.version = 11 : i64} {
  func.func @_layernorm_kernel(%arg0: i32, %arg1: memref<16x32xf32, #tpu.memory_space<vmem>>, %arg2: memref<16x32xf32, #tpu.memory_space<vmem>>) attributes {dimension_semantics = [#tpu.dimension_semantics<parallel>], iteration_bounds = array<i64: 1>, scalar_prefetch = 0 : i64, scratch_operands = 0 : i64, tpu.core_type = #tpu.core_type<tc>, window_params = [{transform_indices = @transform_0, window_bounds = array<i64: 16, 32>}, {transform_indices = @transform_1, window_bounds = array<i64: 16, 32>}]} {
    %c0 = arith.constant 0 : index
    %c0_0 = arith.constant 0 : index
    %0 = vector.load %arg1[%c0, %c0_0] : memref<16x32xf32, #tpu.memory_space<vmem>>, vector<16x32xf32>
    %cst = arith.constant dense<0.000000e+00> : vector<16xf32>
    %1 = vector.multi_reduction <add>, %0, %cst [1] : vector<16x32xf32> to vector<16xf32>
    %2 = vector.shape_cast %1 : vector<16xf32> to vector<16x1xf32>
    %cst_1 = arith.constant 3.125000e-02 : f32
    %3 = vector.broadcast %cst_1 : f32 to vector<16x1xf32>
    %4 = arith.mulf %2, %3 : vector<16x1xf32>
    %5 = vector.broadcast %4 : vector<16x1xf32> to vector<16x32xf32>
    %6 = arith.subf %0, %5 : vector<16x32xf32>
    %7 = arith.mulf %6, %6 : vector<16x32xf32>
    %cst_2 = arith.constant dense<0.000000e+00> : vector<16xf32>
    %8 = vector.multi_reduction <add>, %7, %cst_2 [1] : vector<16x32xf32> to vector<16xf32>
    %9 = vector.shape_cast %8 : vector<16xf32> to vector<16x1xf32>
    %cst_3 = arith.constant 3.100000e+01 : f32
    %10 = vector.broadcast %cst_3 : f32 to vector<16x1xf32>
    %11 = arith.divf %9, %10 : vector<16x1xf32>
    %cst_4 = arith.constant 9.99999974E-6 : f32
    %12 = vector.broadcast %cst_4 : f32 to vector<16x1xf32>
    %13 = arith.addf %11, %12 : vector<16x1xf32>
    %14 = math.rsqrt %13 : vector<16x1xf32>
    %15 = vector.broadcast %14 : vector<16x1xf32> to vector<16x32xf32>
    %16 = arith.mulf %6, %15 : vector<16x32xf32>
    %c0_5 = arith.constant 0 : index
    %c0_6 = arith.constant 0 : index
    %17 = vector.load %arg2[%c0_5, %c0_6] : memref<16x32xf32, #tpu.memory_space<vmem>>, vector<16x32xf32>
    tpu.vector_store %arg2[%c0_5, %c0_6], %16 {strides = array<i32>} : memref<16x32xf32, #tpu.memory_space<vmem>>, vector<16x32xf32>,
    return
  }
  func.func @transform_0(%arg0: i32) -> (i32, i32) {
    %c0_i32 = arith.constant 0 : i32
    %c0_i32_0 = arith.constant 0 : i32
    return %arg0, %c0_i32 : i32, i32
  }
  func.func @transform_1(%arg0: i32) -> (i32, i32) {
    %c0_i32 = arith.constant 0 : i32
    %c0_i32_0 = arith.constant 0 : i32
    return %arg0, %c0_i32 : i32, i32
  }
}

</mosaic_0001>

<llo_original>
// kernel: tpu_custom_call.1
$region0: #{tpu_custom_call.1}
  #allocation0 [shape = 'u32[]', space=smem, size = 0x4, offset = 0x4, fixed_abs, tag = 'smem constant byte address 0x4 - core index']
  #allocation1 [shape = 'u32[72,128]{1,0:T(1,128)}', space=vmem, size = 0x9000, scoped, tag = 'internal scratch']
  %s0 = inlined_call_operand.hbm [shape: f32[16,32], index: 0, kind: input, shape index: {}]
  %s1 = inlined_call_operand.hbm [shape: f32[16,32], index: 1, kind: output, shape index: {}]
  %s2 = sld [smem:[#allocation0]]
  $region18: #{tpu_custom_call.1} parent=0
    _
  %s4 = ssub.s32 1, %s2
  %s5 = scalar_select 0, %s4, %s2
  $region1: #{tpu_custom_call.1} parent=0
    #allocation2 [shape = 'u8[8192]{0}', space=vmem, size = 0x2000, scoped, tag = 'input window, operand 0, single buffered']
    #allocation3 [shape = 's32[1]{0}', space=sflag, size = 0x4, scoped, tag = 'scoped memory for tpu_custom_call.1']
    #allocation4 [shape = 's32[1]{0}', space=sflag, size = 0x4, scoped, tag = 'scoped memory for tpu_custom_call.1']
    #allocation5 [shape = 'u8[8192]{0}', space=vmem, size = 0x2000, scoped, tag = 'output window, operand 0, single buffered']
    %6 = vsyncpa [#allocation3], 0
    %7 = vsyncpa [#allocation4], 0
    // Predicated region
    $region2: #{tpu_custom_call.1} parent=1 // pred_check
      _
    $region3: #{tpu_custom_call.1} parent=1 // pred_check_branch
      %9 = sbr.rel (0) target = $region5
    $region4: #{tpu_custom_call.1} parent=1 // pred_region
      %11 = vsyncadd [#allocation3], 0
      %s12 = sshll.u32 %s0, 4
      %s13 = int_to_ptr.hbm [resolvable:$true] %s12
      %s14 = sshll.u32 [#allocation2], 4
      %s15 = int_to_ptr.vmem [resolvable:$true] %s14
      %20 = dma.hbm_to_vmem [thread:$0]  %s13, 256, %s15, [#allocation3], 128, 128, 8
    $region5: #{tpu_custom_call.1} parent=1 // pred_fallthru
      _
    // Predicated region
    $region6: #{tpu_custom_call.1} parent=1 // pred_check
      _
    $region7: #{tpu_custom_call.1} parent=1 // pred_check_branch
      %22 = sbr.rel (0) target = $region9
    $region8: #{tpu_custom_call.1} parent=1 // pred_region
      %24 = dma.done [#allocation3], 256
    $region9: #{tpu_custom_call.1} parent=1 // pred_fallthru
      _
    %v25 = vld [vmem:[#allocation2] sm:$0xff]
    %v26 = vld [vmem:[#allocation2 + $0x8] sm:$0xff]
    %vm27 = vcmask 261120
    %v28 = vsel %vm27, %v25, 0.0
    %29 = vadd.xlane.f32.xlu0 %v28
    %v30 = vpop.xlane.xlu0 %29
    %v31 = vsel %vm27, %v26, 0.0
    %32 = vadd.xlane.f32.xlu0 %v31
    %v33 = vpop.xlane.xlu0 %32
    %v34 = vmul.f32 %v30, 0.03125
    %v35 = vmul.f32 %v33, 0.03125
    %v36 = vsub.f32 %v25, %v34
    %v37 = vsub.f32 %v26, %v35
    %v38 = vmul.f32 %v36, %v36
    %v39 = vmul.f32 %v37, %v37
    %v40 = vsel %vm27, %v38, 0.0
    %41 = vadd.xlane.f32.xlu0 %v40
    %v42 = vpop.xlane.xlu0 %41
    %v43 = vsel %vm27, %v39, 0.0
    %44 = vadd.xlane.f32.xlu0 %v43
    %v45 = vpop.xlane.xlu0 %44
    %v46 = vrcp.pop 31.0
    %v47 = vmul.f32 31.0, %v46
    %v48 = vsub.f32 1.0, %v47
    %v49 = vmul.f32 %v46, %v48
    %v50 = vadd.f32 %v46, %v49
    %vm51 = vweird.f32 %v46
    %v52 = vsel %vm51, %v46, %v50
    %v53 = vmul.f32 %v42, %v52
    %v54 = vmul.f32 %v45, %v52
    %v55 = vadd.f32 %v53, 1e-05
    %v56 = vadd.f32 %v54, 1e-05
    %v57 = vrsqrt.pop %v55
    %v58 = vmul.f32 %v57, %v55
    %v59 = vmul.f32 %v58, %v57
    %v60 = vmul.f32 0.5, %v59
    %v61 = vsub.f32 1.5, %v60
    %v62 = vmul.f32 %v57, %v61
    %vm63 = vweird.f32 %v55
    %vm64 = vweird.f32 %v57
    %vm65 = vmor %vm63, %vm64
    %v66 = vsel %vm65, %v57, %v62
    %v67 = vrsqrt.pop %v56
    %v68 = vmul.f32 %v67, %v56
    %v69 = vmul.f32 %v68, %v67
    %v70 = vmul.f32 0.5, %v69
    %v71 = vsub.f32 1.5, %v70
    %v72 = vmul.f32 %v67, %v71
    %vm73 = vweird.f32 %v56
    %vm74 = vweird.f32 %v67
    %vm75 = vmor %vm73, %vm74
    %v76 = vsel %vm75, %v67, %v72
    %v77 = vmul.f32 %v36, %v66
    %v78 = vmul.f32 %v37, %v76
    %79 = vst.msk [vmem:[#allocation5] sm:$0xff] %vm27, %v77
    %80 = vst.msk [vmem:[#allocation5 + $0x8] sm:$0xff] %vm27, %v78
    // Predicated region
    $region10: #{tpu_custom_call.1} parent=1 // pred_check
      _
    $region11: #{tpu_custom_call.1} parent=1 // pred_check_branch
      %82 = sbr.rel (0) target = $region13
    $region12: #{tpu_custom_call.1} parent=1 // pred_region
      %84 = vsyncadd [#allocation4], 0
      %s85 = sshll.u32 [#allocation5], 4
      %s86 = int_to_ptr.vmem [resolvable:$true] %s85
      %s87 = sshll.u32 %s1, 4
      %s88 = int_to_ptr.hbm [resolvable:$true] %s87
      %93 = dma.vmem_to_hbm [thread:$0]  %s86, 256, %s88, [#allocation4], 128, 128, 8
    $region13: #{tpu_custom_call.1} parent=1 // pred_fallthru
      _
    // Predicated region
    $region14: #{tpu_custom_call.1} parent=1 // pred_check
      _
    $region15: #{tpu_custom_call.1} parent=1 // pred_check_branch
      %95 = sbr.rel (0) target = $region17
    $region16: #{tpu_custom_call.1} parent=1 // pred_region
      %97 = dma.done [#allocation4], 256
    $region17: #{tpu_custom_call.1} parent=1 // pred_fallthru
      _
    %98 = vsyncpa [#allocation3], 1
    %99 = vsyncpa [#allocation4], 1

</llo_original>
